<compile_context>
chip_gen: v6e
topology: v6e:2x2x1
jax: 0.10.0
libtpu: 0.0.40
codegen_flags: <defaults>
</compile_context>

<pallas_src>
import jax
import jax.numpy as jnp
import numpy as np
from jax.experimental import pallas as pl
from jax.experimental.pallas import tpu as pltpu


def _dep_prox_kernel(astart_ref, aend_ref, tlen_ref, alen_ref,
                     x_ref, dep_ref, out_ref):
    b = pl.program_id(0)          # batch index
    s_blk = pl.program_id(1)      # seq-tile index
    tile_s = x_ref.shape[0]

    # Per-batch scalars from SMEM (scalar path, no vector work).
    astart = astart_ref[b]
    aend = aend_ref[b]
    tl = tlen_ref[b]
    al = alen_ref[b]

    # Sequence position of every sublane row in this tile: (tile_s, 1).
    pos = s_blk * tile_s + jax.lax.broadcasted_iota(jnp.int32, (tile_s, 1), 0)

    # Clamp avoids 0-div NaN when text_len == aspect_len (those rows are fully
    # masked to zero anyway, so the clamp never changes the result).
    ctx = jnp.maximum(tl - al, 1).astype(jnp.float32)
    inv = jnp.float32(1.0) / ctx                      # one scalar reciprocal / step

    dep = dep_ref[...]                                # (tile_s, 1) f32
    w = jnp.float32(1.0) - dep * inv                  # (tile_s, 1)

    masked = ((pos >= astart) & (pos <= aend)) | (pos >= tl)
    w = jnp.where(masked, jnp.float32(0.0), w)        # (tile_s, 1)

    # Per-sublane scalar broadcast across the H lanes: single VPU FMA per vreg.
    out_ref[...] = (w * x_ref[...]).astype(out_ref.dtype)


def _pick_tile_s(S):
    for cand in (512, 256, 128, 64, 32, 16, 8):
        if S % cand == 0:
            return cand
    return S  # fall back to full seq (block dim == array dim is always legal)


def dependency_proximity(x, aspect_double_idx, text_len, aspect_len,
                         dependency_dist, *, tile_s=None):
    """x: (B, S, H); metadata is integer-valued per-batch. Output keeps x's dtype."""
    B, S, H = x.shape

    dep = dependency_dist.astype(jnp.float32).reshape(B, S, 1)
    adx = aspect_double_idx.astype(jnp.int32).reshape(B, 2)
    astart = adx[:, 0]
    aend = adx[:, 1]
    tl = text_len.astype(jnp.int32).reshape(B)
    al = aspect_len.astype(jnp.int32).reshape(B)

    if tile_s is None:
        tile_s = _pick_tile_s(S)
    grid = (B, S // tile_s)

    # Budget: double-buffered x + out + dep blocks, with headroom; stays well
    # under v7x's 64 MiB physical VMEM for any realistic (tile_s, H).
    block_bytes = tile_s * (H * x.dtype.itemsize * 2 + 4)
    vmem_limit = int(min(max(4 * block_bytes + (2 << 20), 8 << 20), 32 << 20))

    return pl.pallas_call(
        _dep_prox_kernel,
        out_shape=jax.ShapeDtypeStruct((B, S, H), x.dtype),
        grid=grid,
        in_specs=[
            pl.BlockSpec(memory_space=pltpu.SMEM),                      # aspect start (B,)
            pl.BlockSpec(memory_space=pltpu.SMEM),                      # aspect end   (B,)
            pl.BlockSpec(memory_space=pltpu.SMEM),                      # text_len     (B,)
            pl.BlockSpec(memory_space=pltpu.SMEM),                      # aspect_len   (B,)
            pl.BlockSpec((None, tile_s, H), lambda b, s: (b, s, 0)),    # x tile
            pl.BlockSpec((None, tile_s, 1), lambda b, s: (b, s, 0)),    # dep tile
        ],
        out_specs=pl.BlockSpec((None, tile_s, H), lambda b, s: (b, s, 0)),
        compiler_params=pltpu.CompilerParams(
            dimension_semantics=("parallel", "parallel"),
            vmem_limit_bytes=vmem_limit,
        ),
    )(astart, aend, tl, al, x, dep)


def _reference_numpy(x, aspect_double_idx, text_len, aspect_len, dependency_dist):
    # Direct port of the PyTorch weight_matrix loops, for correctness checking.
    x = np.asarray(x, np.float32)
    adx = np.asarray(aspect_double_idx)
    tl = np.asarray(text_len)
    al = np.asarray(aspect_len)
    dep = np.asarray(dependency_dist)
    B, S, _ = x.shape
    weight = np.zeros((B, S), np.float32)
    for i in range(B):
        context_len = tl[i] - al[i]
        row = []
        for j in range(adx[i, 0]):
            row.append(1 - dep[i, j] / context_len)
        for j in range(adx[i, 0], adx[i, 1] + 1):
            row.append(0.0)
        for j in range(adx[i, 1] + 1, tl[i]):
            row.append(1 - dep[i, j] / context_len)
        for j in range(tl[i], S):
            row.append(0.0)
        weight[i] = np.asarray(row, np.float32)
    return weight[:, :, None] * x


if __name__ == "__main__":
    B, S, H = 2, 8, 32
    key = jax.random.PRNGKey(0)
    kx, kd = jax.random.split(key)

    x = jax.random.normal(kx, (B, S, H), dtype=jnp.float32)
    dependency_dist = jax.random.randint(kd, (B, S), 0, 6).astype(jnp.int32)
    aspect_double_idx = jnp.array([[3, 4], [2, 2]], dtype=jnp.int32)
    text_len = jnp.array([8, 6], dtype=jnp.int32)
    aspect_len = jnp.array([2, 1], dtype=jnp.int32)

    out = dependency_proximity(x, aspect_double_idx, text_len, aspect_len,
                               dependency_dist)
    out = jax.block_until_ready(out)

    ref = _reference_numpy(np.asarray(x), np.asarray(aspect_double_idx),
                           np.asarray(text_len), np.asarray(aspect_len),
                           np.asarray(dependency_dist))
    np.testing.assert_allclose(np.asarray(out), ref, rtol=1e-5, atol=1e-5)
    print("KERNEL_OK")
</pallas_src>

<mosaic_0001>
module attributes {stable_mosaic.version = 11 : i64} {
  func.func @_dep_prox_kernel(%arg0: i32, %arg1: i32, %arg2: memref<2xi32, #tpu.memory_space<smem>>, %arg3: memref<2xi32, #tpu.memory_space<smem>>, %arg4: memref<2xi32, #tpu.memory_space<smem>>, %arg5: memref<2xi32, #tpu.memory_space<smem>>, %arg6: memref<1x8x32xf32, #tpu.memory_space<vmem>>, %arg7: memref<1x8x1xf32, #tpu.memory_space<vmem>>, %arg8: memref<1x8x32xf32, #tpu.memory_space<vmem>>) attributes {dimension_semantics = [#tpu.dimension_semantics<parallel>, #tpu.dimension_semantics<parallel>], iteration_bounds = array<i64: 2, 1>, scalar_prefetch = 0 : i64, scratch_operands = 0 : i64, tpu.core_type = #tpu.core_type<tc>, window_params = [{transform_indices = @transform_0, window_bounds = array<i64: 2>}, {transform_indices = @transform_1, window_bounds = array<i64: 2>}, {transform_indices = @transform_2, window_bounds = array<i64: 2>}, {transform_indices = @transform_3, window_bounds = array<i64: 2>}, {transform_indices = @transform_4, window_bounds = array<i64: 1, 8, 32>}, {transform_indices = @transform_5, window_bounds = array<i64: 1, 8, 1>}, {transform_indices = @transform_6, window_bounds = array<i64: 1, 8, 32>}]} {
    %0 = arith.index_cast %arg0 : i32 to index
    %1 = memref.load %arg2[%0] : memref<2xi32, #tpu.memory_space<smem>>
    %2 = arith.index_cast %arg0 : i32 to index
    %3 = memref.load %arg3[%2] : memref<2xi32, #tpu.memory_space<smem>>
    %4 = arith.index_cast %arg0 : i32 to index
    %5 = memref.load %arg4[%4] : memref<2xi32, #tpu.memory_space<smem>>
    %6 = arith.index_cast %arg0 : i32 to index
    %7 = memref.load %arg5[%6] : memref<2xi32, #tpu.memory_space<smem>>
    %c8_i32 = arith.constant 8 : i32
    %8 = arith.muli %arg1, %c8_i32 : i32
    %9 = tpu.iota {dimensions = array<i32: 0>} : vector<8x1xi32>
    %10 = vector.broadcast %8 : i32 to vector<8x1xi32>
    %11 = arith.addi %10, %9 : vector<8x1xi32>
    %12 = arith.subi %5, %7 : i32
    %c1_i32 = arith.constant 1 : i32
    %13 = arith.maxsi %12, %c1_i32 : i32
    %14 = arith.sitofp %13 : i32 to f32
    %cst = arith.constant 1.000000e+00 : f32
    %15 = arith.divf %cst, %14 : f32
    %c0 = arith.constant 0 : index
    %c0_0 = arith.constant 0 : index
    %c0_1 = arith.constant 0 : index
    %16 = vector.load %arg7[%c0, %c0_0, %c0_1] : memref<1x8x1xf32, #tpu.memory_space<vmem>>, vector<1x8x1xf32>
    %17 = vector.shape_cast %16 : vector<1x8x1xf32> to vector<8x1xf32>
    %18 = vector.broadcast %15 : f32 to vector<8x1xf32>
    %19 = arith.mulf %17, %18 : vector<8x1xf32>
    %cst_2 = arith.constant 1.000000e+00 : f32
    %20 = vector.broadcast %cst_2 : f32 to vector<8x1xf32>
    %21 = arith.subf %20, %19 : vector<8x1xf32>
    %22 = vector.broadcast %1 : i32 to vector<8x1xi32>
    %23 = arith.cmpi sge, %11, %22 : vector<8x1xi32>
    %24 = vector.broadcast %3 : i32 to vector<8x1xi32>
    %25 = arith.cmpi sle, %11, %24 : vector<8x1xi32>
    %26 = arith.andi %23, %25 : vector<8x1xi1>
    %27 = vector.broadcast %5 : i32 to vector<8x1xi32>
    %28 = arith.cmpi sge, %11, %27 : vector<8x1xi32>
    %29 = arith.ori %26, %28 : vector<8x1xi1>
    %cst_3 = arith.constant 0.000000e+00 : f32
    %30 = vector.broadcast %cst_3 : f32 to vector<8x1xf32>
    %31 = arith.select %29, %30, %21 : vector<8x1xi1>, vector<8x1xf32>
    %c0_4 = arith.constant 0 : index
    %c0_5 = arith.constant 0 : index
    %c0_6 = arith.constant 0 : index
    %32 = vector.load %arg6[%c0_4, %c0_5, %c0_6] : memref<1x8x32xf32, #tpu.memory_space<vmem>>, vector<1x8x32xf32>
    %33 = vector.shape_cast %32 : vector<1x8x32xf32> to vector<8x32xf32>
    %34 = vector.broadcast %31 : vector<8x1xf32> to vector<8x32xf32>
    %35 = arith.mulf %34, %33 : vector<8x32xf32>
    %c0_7 = arith.constant 0 : index
    %c0_8 = arith.constant 0 : index
    %c0_9 = arith.constant 0 : index
    %36 = vector.load %arg8[%c0_7, %c0_8, %c0_9] : memref<1x8x32xf32, #tpu.memory_space<vmem>>, vector<1x8x32xf32>
    %37 = vector.shape_cast %36 : vector<1x8x32xf32> to vector<8x32xf32>
    %38 = vector.shape_cast %35 : vector<8x32xf32> to vector<1x8x32xf32>
    tpu.vector_store %arg8[%c0_7, %c0_8, %c0_9], %38 {strides = array<i32>} : memref<1x8x32xf32, #tpu.memory_space<vmem>>, vector<1x8x32xf32>,
    return
  }
  func.func @transform_0(%arg0: i32, %arg1: i32) -> i32 {
    %c0_i32 = arith.constant 0 : i32
    %c0_i32_0 = arith.constant 0 : i32
    return %c0_i32 : i32
  }
  func.func @transform_1(%arg0: i32, %arg1: i32) -> i32 {
    %c0_i32 = arith.constant 0 : i32
    %c0_i32_0 = arith.constant 0 : i32
    return %c0_i32 : i32
  }
  func.func @transform_2(%arg0: i32, %arg1: i32) -> i32 {
    %c0_i32 = arith.constant 0 : i32
    %c0_i32_0 = arith.constant 0 : i32
    return %c0_i32 : i32
  }
  func.func @transform_3(%arg0: i32, %arg1: i32) -> i32 {
    %c0_i32 = arith.constant 0 : i32
    %c0_i32_0 = arith.constant 0 : i32
    return %c0_i32 : i32
  }
  func.func @transform_4(%arg0: i32, %arg1: i32) -> (i32, i32, i32) {
    %c0_i32 = arith.constant 0 : i32
    %c0_i32_0 = arith.constant 0 : i32
    return %arg0, %arg1, %c0_i32 : i32, i32, i32
  }
  func.func @transform_5(%arg0: i32, %arg1: i32) -> (i32, i32, i32) {
    %c0_i32 = arith.constant 0 : i32
    %c0_i32_0 = arith.constant 0 : i32
    return %arg0, %arg1, %c0_i32 : i32, i32, i32
  }
  func.func @transform_6(%arg0: i32, %arg1: i32) -> (i32, i32, i32) {
    %c0_i32 = arith.constant 0 : i32
    %c0_i32_0 = arith.constant 0 : i32
    return %arg0, %arg1, %c0_i32 : i32, i32, i32
  }
}

</mosaic_0001>

<llo_original>
// kernel: tpu_custom_call.1
$region0: #{tpu_custom_call.1}
  #allocation0 [shape = 'u32[]', space=smem, size = 0x4, offset = 0x4, fixed_abs, tag = 'smem constant byte address 0x4 - core index']
  #allocation1 [shape = 'u32[144,128]{1,0:T(1,128)}', space=vmem, size = 0x12000, scoped, tag = 'internal scratch']
  %s0 = inlined_call_operand.vmem [shape: s32[2], index: 0, kind: input, shape index: {}]
  %s1 = inlined_call_operand.vmem [shape: s32[2], index: 1, kind: input, shape index: {}]
  %s2 = inlined_call_operand.vmem [shape: s32[2], index: 2, kind: input, shape index: {}]
  %s3 = inlined_call_operand.vmem [shape: s32[2], index: 3, kind: input, shape index: {}]
  %s4 = inlined_call_operand.vmem [shape: f32[2,8,32], index: 4, kind: input, shape index: {}]
  %s5 = inlined_call_operand.vmem [shape: f32[2,8,1], index: 5, kind: input, shape index: {}]
  %s6 = inlined_call_operand.hbm [shape: f32[2,8,32], index: 6, kind: output, shape index: {}]
  %s7 = sld [smem:[#allocation0]]
  $region73: #{tpu_custom_call.1} parent=0
    _
  %s9 = ssub.s32 1, %s7
  %s10 = scalar_select 0, %s9, %s7
  $region1: #{tpu_custom_call.1} parent=0
    #allocation2 [shape = 'u8[512]{0}', space=smem, size = 0x200, scoped, tag = 'input window, operand 0, single buffered']
    #allocation3 [shape = 's32[2]{0}', space=sflag, size = 0x8, scoped, tag = 'scoped memory for tpu_custom_call.1']
    #allocation4 [shape = 's32[2]{0}', space=sflag, size = 0x8, scoped, tag = 'scoped memory for tpu_custom_call.1']
    #allocation5 [shape = 'u8[512]{0}', space=smem, size = 0x200, scoped, tag = 'input window, operand 1, single buffered']
    #allocation6 [shape = 's32[1]{0}', space=sflag, size = 0x4, scoped, tag = 'scoped memory for tpu_custom_call.1']
    #allocation7 [shape = 'u8[512]{0}', space=smem, size = 0x200, scoped, tag = 'input window, operand 2, single buffered']
    #allocation8 [shape = 'u8[512]{0}', space=smem, size = 0x200, scoped, tag = 'input window, operand 3, single buffered']
    #allocation9 [shape = 's32[1]{0}', space=sflag, size = 0x4, scoped, tag = 'scoped memory for tpu_custom_call.1']
    #allocation10 [shape = 'u8[8192]{0}', space=vmem, size = 0x2000, scoped, tag = 'output window, operand 0']
    %11 = vsyncpa [#allocation4], 0
    %12 = vsyncpa [#allocation6], 0
    %13 = vsyncpa [#allocation9], 0
    %14 = vsyncpa [#allocation3], 0
    %s15 = scalar_lea.sflag [#allocation3], 1
    %16 = vsyncpa %s15, 0
    loop: start=0, step=1, limit=4
    $region2: #{tpu_custom_call.1} parent=1 // loop_pre_header
      _
    $region3: #{tpu_custom_call.1} parent=1 // loop_header
      %s18 = sphi 0, %s22
      %p19 = scmp.ge.s32.totalorder %s18, 4
      %s25 = sphi 0, %s37
      %s26 = sphi 0, %s33
      %s27 = sphi 0, %s25
      %s28 = sphi 0, %s26
      %s29 = sphi 0, %s27
      %s30 = sphi 0, %s28
      %s38 = sphi 0, %s38
      %s40 = sphi 0, %s38
      %s41 = sphi 0, %s40
      %s55 = sphi 0, %s41
      %s59 = sphi 0, %s59
      %s61 = sphi 0, %s59
      %s62 = sphi 0, %s61
      %s76 = sphi 0, %s62
      %s80 = sphi 0, %s80
      %s82 = sphi 0, %s80
      %s83 = sphi 0, %s82
      %s97 = sphi 0, %s83
      %s101 = sphi 0, %s101
      %s103 = sphi 0, %s101
      %s104 = sphi 0, %s103
      %s118 = sphi 0, %s104
      %s126 = sphi 0, %s128
      %s129 = sphi 0, %s126
      %s130 = sphi 0, %s129
      %s146 = sphi 0, %s130
      %s154 = sphi 0, %s156
      %s157 = sphi 0, %s154
      %s158 = sphi 0, %s157
      %s174 = sphi 0, %s158
      %s182 = sphi 0, %s184
      %s185 = sphi 0, %s182
      %s186 = sphi 0, %s185
      %s202 = sphi 0, %s186
    $region4: #{tpu_custom_call.1} parent=1 // loop_header_branch
      %21 = sbr.rel (%p19) target = $region8
    $region5: #{tpu_custom_call.1} parent=1 // loop_body
      %s23 = ssub.s32 %s18, 1
      %s24 = ssub.s32 %s18, 2
      %s31 = sadd.s32 1, %s26
      %p32 = scmp.ge.s32.totalorder %s31, 1
      %s33 = scalar_select %p32, 0, %s31
      %s34 = sadd.s32 1, %s25
      %s35 = scalar_select %p32, %s34, %s25
      %p36 = scmp.ge.s32.totalorder %s35, 2
      %s37 = scalar_select %p36, 0, %s35
      %s39 = sadd.s32 %s38, 1
      %p42 = scmp.eq.s32.totalorder %s18, 1
      %p43 = scmp.ne.s32.totalorder %s38, %s40
      %p44 = scmp.eq.s32.totalorder %s18, 0
      %p45 = por %p43, %p44
      %p46 = scmp.ne.s32.totalorder %s38, %s40
      %p47 = scmp.eq.s32.totalorder %s23, 1
      %p48 = por %p46, %p47
      %p49 = scmp.ne.s32.totalorder %s40, %s41
      %p50 = scmp.eq.s32.totalorder %s23, 0
      %p51 = por %p49, %p50
      %p52 = scmp.ne.s32.totalorder %s40, %s41
      %p53 = scmp.eq.s32.totalorder %s24, 1
      %p54 = por %p52, %p53
      %p56 = scmp.ne.s32.totalorder %s41, %s55
      %p57 = scmp.eq.s32.totalorder %s24, 0
      %p58 = por %p56, %p57
      %s60 = sadd.s32 %s59, 1
      %p63 = scmp.eq.s32.totalorder %s18, 1
      %p64 = scmp.ne.s32.totalorder %s59, %s61
      %p65 = scmp.eq.s32.totalorder %s18, 0
      %p66 = por %p64, %p65
      %p67 = scmp.ne.s32.totalorder %s59, %s61
      %p68 = scmp.eq.s32.totalorder %s23, 1
      %p69 = por %p67, %p68
      %p70 = scmp.ne.s32.totalorder %s61, %s62
      %p71 = scmp.eq.s32.totalorder %s23, 0
      %p72 = por %p70, %p71
      %p73 = scmp.ne.s32.totalorder %s61, %s62
      %p74 = scmp.eq.s32.totalorder %s24, 1
      %p75 = por %p73, %p74
      %p77 = scmp.ne.s32.totalorder %s62, %s76
      %p78 = scmp.eq.s32.totalorder %s24, 0
      %p79 = por %p77, %p78
      %s81 = sadd.s32 %s80, 1
      %p84 = scmp.eq.s32.totalorder %s18, 1
      %p85 = scmp.ne.s32.totalorder %s80, %s82
      %p86 = scmp.eq.s32.totalorder %s18, 0
      %p87 = por %p85, %p86
      %p88 = scmp.ne.s32.totalorder %s80, %s82
      %p89 = scmp.eq.s32.totalorder %s23, 1
      %p90 = por %p88, %p89
      %p91 = scmp.ne.s32.totalorder %s82, %s83
      %p92 = scmp.eq.s32.totalorder %s23, 0
      %p93 = por %p91, %p92
      %p94 = scmp.ne.s32.totalorder %s82, %s83
      %p95 = scmp.eq.s32.totalorder %s24, 1
      %p96 = por %p94, %p95
      %p98 = scmp.ne.s32.totalorder %s83, %s97
      %p99 = scmp.eq.s32.totalorder %s24, 0
      %p100 = por %p98, %p99
      %s102 = sadd.s32 %s101, 1
      %p105 = scmp.eq.s32.totalorder %s18, 1
      %p106 = scmp.ne.s32.totalorder %s101, %s103
      %p107 = scmp.eq.s32.totalorder %s18, 0
      %p108 = por %p106, %p107
      %p109 = scmp.ne.s32.totalorder %s101, %s103
      %p110 = scmp.eq.s32.totalorder %s23, 1
      %p111 = por %p109, %p110
      %p112 = scmp.ne.s32.totalorder %s103, %s104
      %p113 = scmp.eq.s32.totalorder %s23, 0
      %p114 = por %p112, %p113
      %p115 = scmp.ne.s32.totalorder %s103, %s104
      %p116 = scmp.eq.s32.totalorder %s24, 1
      %p117 = por %p115, %p116
      %p119 = scmp.ne.s32.totalorder %s104, %s118
      %p120 = scmp.eq.s32.totalorder %s24, 0
      %p121 = por %p119, %p120
      %s122 = ssub.s32 %s25, %s37
      %s123 = ssub.s32 %s26, %s33
      %s124 = sor.u32 %s122, %s123
      %p125 = scmp.eq.s32.totalorder %s124, 0
      %s127 = sadd.s32 %s126, 1
      %s128 = scalar_select %p125, %s126, %s127
      %p131 = pneg %p125
      %p132 = scmp.eq.s32.totalorder %s18, 1
      %p133 = por %p131, %p132
      %p134 = scmp.ne.s32.totalorder %s126, %s129
      %p135 = scmp.eq.s32.totalorder %s18, 0
      %p136 = por %p134, %p135
      %p137 = scmp.ne.s32.totalorder %s126, %s129
      %p138 = scmp.eq.s32.totalorder %s23, 1
      %p139 = por %p137, %p138
      %p140 = scmp.ne.s32.totalorder %s129, %s130
      %p141 = scmp.eq.s32.totalorder %s23, 0
      %p142 = por %p140, %p141
      %p143 = scmp.ne.s32.totalorder %s129, %s130
      %p144 = scmp.eq.s32.totalorder %s24, 1
      %p145 = por %p143, %p144
      %p147 = scmp.ne.s32.totalorder %s130, %s146
      %p148 = scmp.eq.s32.totalorder %s24, 0
      %p149 = por %p147, %p148
      %s150 = ssub.s32 %s25, %s37
      %s151 = ssub.s32 %s26, %s33
      %s152 = sor.u32 %s150, %s151
      %p153 = scmp.eq.s32.totalorder %s152, 0
      %s155 = sadd.s32 %s154, 1
      %s156 = scalar_select %p153, %s154, %s155
      %p159 = pneg %p153
      %p160 = scmp.eq.s32.totalorder %s18, 1
      %p161 = por %p159, %p160
      %p162 = scmp.ne.s32.totalorder %s154, %s157
      %p163 = scmp.eq.s32.totalorder %s18, 0
      %p164 = por %p162, %p163
      %p165 = scmp.ne.s32.totalorder %s154, %s157
      %p166 = scmp.eq.s32.totalorder %s23, 1
      %p167 = por %p165, %p166
      %p168 = scmp.ne.s32.totalorder %s157, %s158
      %p169 = scmp.eq.s32.totalorder %s23, 0
      %p170 = por %p168, %p169
      %p171 = scmp.ne.s32.totalorder %s157, %s158
      %p172 = scmp.eq.s32.totalorder %s24, 1
      %p173 = por %p171, %p172
      %p175 = scmp.ne.s32.totalorder %s158, %s174
      %p176 = scmp.eq.s32.totalorder %s24, 0
      %p177 = por %p175, %p176
      %s178 = ssub.s32 %s25, %s37
      %s179 = ssub.s32 %s26, %s33
      %s180 = sor.u32 %s178, %s179
      %p181 = scmp.eq.s32.totalorder %s180, 0
      %s183 = sadd.s32 %s182, 1
      %s184 = scalar_select %p181, %s182, %s183
      %p187 = pneg %p181
      %p188 = scmp.eq.s32.totalorder %s18, 1
      %p189 = por %p187, %p188
      %p190 = scmp.ne.s32.totalorder %s182, %s185
      %p191 = scmp.eq.s32.totalorder %s18, 0
      %p192 = por %p190, %p191
      %p193 = scmp.ne.s32.totalorder %s182, %s185
      %p194 = scmp.eq.s32.totalorder %s23, 1
      %p195 = por %p193, %p194
      %p196 = scmp.ne.s32.totalorder %s185, %s186
      %p197 = scmp.eq.s32.totalorder %s23, 0
      %p198 = por %p196, %p197
      %p199 = scmp.ne.s32.totalorder %s185, %s186
      %p200 = scmp.eq.s32.totalorder %s24, 1
      %p201 = por %p199, %p200
      %p203 = scmp.ne.s32.totalorder %s186, %s202
      %p204 = scmp.eq.s32.totalorder %s24, 0
      %p205 = por %p203, %p204
      %p206 = scmp.le.s32.totalorder 1, %s18
      %p207 = scmp.lt.s32.totalorder %s18, 3
      %p208 = pnand %p206, %p207
      %p209 = pneg %p208
      // Predicated region
      $region9: #{tpu_custom_call.1} parent=5 // pred_check
        _
      $region10: #{tpu_custom_call.1} parent=5 // pred_check_branch
        %211 = sbr.rel (%p208) target = $region12
      $region11: #{tpu_custom_call.1} parent=5 // pred_region
        %s212 = ssub.s32 %s18, 1
        // Predicated region
        $region13: #{tpu_custom_call.1} parent=11 // pred_check
          %p213 = pneg %p51
        $region14: #{tpu_custom_call.1} parent=11 // pred_check_branch
          %215 = sbr.rel (%p213) target = $region16
        $region15: #{tpu_custom_call.1} parent=11 // pred_region
          %s217 = ssub.s32 16, 16
          %218 = vsyncadd [#allocation4], %s217
          %s220 = sshll.u32 %s0, 4
          %s221 = int_to_ptr.vmem [resolvable:$true] %s220
          %223 = dma.vmem_to_smem %s221, 16, [#allocation2], [#allocation4]
        $region16: #{tpu_custom_call.1} parent=11 // pred_fallthru
          _
        // Predicated region
        $region17: #{tpu_custom_call.1} parent=11 // pred_check
          %p224 = pneg %p72
        $region18: #{tpu_custom_call.1} parent=11 // pred_check_branch
          %226 = sbr.rel (%p224) target = $region20
        $region19: #{tpu_custom_call.1} parent=11 // pred_region
          %s228 = ssub.s32 16, 16
          %229 = vsyncadd [#allocation6], %s228
          %s231 = sshll.u32 %s1, 4
          %s232 = int_to_ptr.vmem [resolvable:$true] %s231
          %234 = dma.vmem_to_smem %s232, 16, [#allocation5], [#allocation6]
        $region20: #{tpu_custom_call.1} parent=11 // pred_fallthru
          _
        // Predicated region
        $region21: #{tpu_custom_call.1} parent=11 // pred_check
          %p235 = pneg %p93
        $region22: #{tpu_custom_call.1} parent=11 // pred_check_branch
          %237 = sbr.rel (%p235) target = $region24
        $region23: #{tpu_custom_call.1} parent=11 // pred_region
          %s239 = ssub.s32 16, 16
          %240 = vsyncadd [#allocation6], %s239
          %s242 = sshll.u32 %s2, 4
          %s243 = int_to_ptr.vmem [resolvable:$true] %s242
          %245 = dma.vmem_to_smem %s243, 16, [#allocation7], [#allocation6]
        $region24: #{tpu_custom_call.1} parent=11 // pred_fallthru
          _
        // Predicated region
        $region25: #{tpu_custom_call.1} parent=11 // pred_check
          %p246 = pneg %p114
        $region26: #{tpu_custom_call.1} parent=11 // pred_check_branch
          %248 = sbr.rel (%p246) target = $region28
        $region27: #{tpu_custom_call.1} parent=11 // pred_region
          %s250 = ssub.s32 16, 16
          %251 = vsyncadd [#allocation9], %s250
          %s253 = sshll.u32 %s3, 4
          %s254 = int_to_ptr.vmem [resolvable:$true] %s253
          %256 = dma.vmem_to_smem %s254, 16, [#allocation8], [#allocation9]
        $region28: #{tpu_custom_call.1} parent=11 // pred_fallthru
          _
      $region12: #{tpu_custom_call.1} parent=5 // pred_fallthru
        _
      %p257 = scmp.lt.s32.totalorder %s18, 2
      // Predicated region
      $region29: #{tpu_custom_call.1} parent=5 // pred_check
        %p258 = pneg %p257
      $region30: #{tpu_custom_call.1} parent=5 // pred_check_branch
        %260 = sbr.rel (%p258) target = $region32
      $region31: #{tpu_custom_call.1} parent=5 // pred_region
        // Predicated region
        $region33: #{tpu_custom_call.1} parent=31 // pred_check
          %p261 = pneg %p136
        $region34: #{tpu_custom_call.1} parent=31 // pred_check_branch
          %263 = sbr.rel (%p261) target = $region36
        $region35: #{tpu_custom_call.1} parent=31 // pred_region
          %p264 = scmp.lt.s32.totalorder %s25, 1
          %s265 = scalar_select %p264, %s25, 1
          %p266 = scmp.lt.s32.totalorder %s26, 0
          %s267 = scalar_select %p266, %s26, 0
          %s268 = sadd.s32 %s267, %s265
          %s269 = smul.addr %s268, 8
          %s270 = scalar_lea.vmem %s4, %s269
        $region36: #{tpu_custom_call.1} parent=31 // pred_fallthru
          _
        // Predicated region
        $region37: #{tpu_custom_call.1} parent=31 // pred_check
          %p271 = pneg %p164
        $region38: #{tpu_custom_call.1} parent=31 // pred_check_branch
          %273 = sbr.rel (%p271) target = $region40
        $region39: #{tpu_custom_call.1} parent=31 // pred_region
          %p274 = scmp.lt.s32.totalorder %s25, 1
          %s275 = scalar_select %p274, %s25, 1
          %p276 = scmp.lt.s32.totalorder %s26, 0
          %s277 = scalar_select %p276, %s26, 0
          %s278 = sadd.s32 %s277, %s275
          %s279 = smul.addr %s278, 8
          %s280 = scalar_lea.vmem %s5, %s279
        $region40: #{tpu_custom_call.1} parent=31 // pred_fallthru
          _
      $region32: #{tpu_custom_call.1} parent=5 // pred_fallthru
        _
      %p281 = scmp.le.s32.totalorder 1, %s18
      %p282 = scmp.lt.s32.totalorder %s18, 3
      %p283 = pnand %p281, %p282
      %p284 = pneg %p283
      // Predicated region
      $region41: #{tpu_custom_call.1} parent=5 // pred_check
        _
      $region42: #{tpu_custom_call.1} parent=5 // pred_check_branch
        %286 = sbr.rel (%p283) target = $region44
      $region43: #{tpu_custom_call.1} parent=5 // pred_region
        %s287 = ssub.s32 %s18, 1
        // Predicated region
        $region45: #{tpu_custom_call.1} parent=43 // pred_check
          %p288 = pneg %p51
        $region46: #{tpu_custom_call.1} parent=43 // pred_check_branch
          %290 = sbr.rel (%p288) target = $region48
        $region47: #{tpu_custom_call.1} parent=43 // pred_region
          %291 = dma.done [#allocation4], 16
        $region48: #{tpu_custom_call.1} parent=43 // pred_fallthru
          _
        // Predicated region
        $region49: #{tpu_custom_call.1} parent=43 // pred_check
          %p292 = pneg %p72
        $region50: #{tpu_custom_call.1} parent=43 // pred_check_branch
          %294 = sbr.rel (%p292) target = $region52
        $region51: #{tpu_custom_call.1} parent=43 // pred_region
          %295 = dma.done [#allocation6], 16
        $region52: #{tpu_custom_call.1} parent=43 // pred_fallthru
          _
        // Predicated region
        $region53: #{tpu_custom_call.1} parent=43 // pred_check
          %p296 = pneg %p93
        $region54: #{tpu_custom_call.1} parent=43 // pred_check_branch
          %298 = sbr.rel (%p296) target = $region56
        $region55: #{tpu_custom_call.1} parent=43 // pred_region
          %299 = dma.done [#allocation6], 16
        $region56: #{tpu_custom_call.1} parent=43 // pred_fallthru
          _
        // Predicated region
        $region57: #{tpu_custom_call.1} parent=43 // pred_check
          %p300 = pneg %p114
        $region58: #{tpu_custom_call.1} parent=43 // pred_check_branch
          %302 = sbr.rel (%p300) target = $region60
        $region59: #{tpu_custom_call.1} parent=43 // pred_region
          %303 = dma.done [#allocation9], 16
        $region60: #{tpu_custom_call.1} parent=43 // pred_fallthru
          _
        %304 = sfence
        %p305 = pneg %p51
        %p306 = pneg %p48
        %p307 = pneg %p72
        %p308 = pneg %p69
        %p309 = pneg %p93
        %p310 = pneg %p90
        %p311 = pneg %p114
        %p312 = pneg %p111
        %p313 = scmp.lt.s32.totalorder %s27, 1
        %s314 = scalar_select %p313, %s27, 1
        %p315 = scmp.lt.s32.totalorder %s28, 0
        %s316 = scalar_select %p315, %s28, 0
        %s317 = sadd.s32 %s316, %s314
        %s318 = smul.addr %s317, 8
        %s319 = scalar_lea.vmem %s4, %s318
        %p320 = pneg %p142
        %p321 = pneg %p139
        %p322 = scmp.lt.s32.totalorder %s27, 1
        %s323 = scalar_select %p322, %s27, 1
        %p324 = scmp.lt.s32.totalorder %s28, 0
        %s325 = scalar_select %p324, %s28, 0
        %s326 = sadd.s32 %s325, %s323
        %s327 = smul.addr %s326, 8
        %s328 = scalar_lea.vmem %s5, %s327
        %p329 = pneg %p170
        %p330 = pneg %p167
        %p331 = pneg %p198
        %p332 = pneg %p195
        %s333 = sand.u32 %s185, 1
        %s334 = scalar_lea.sflag [#allocation3], %s333
        %s335 = sand.u32 %s185, 1
        %s336 = smul.addr %s335, 8
        %s337 = scalar_lea.vmem [#allocation10], %s336
        %p338 = scmp.lt.s32.totalorder %s27, 1
        %s339 = scalar_select %p338, %s27, 1
        %p340 = scmp.lt.s32.totalorder %s28, 0
        %s341 = scalar_select %p340, %s28, 0
        %s342 = sadd.s32 %s341, %s339
        %s343 = smul.addr %s342, 8
        %s344 = scalar_lea.vmem %s4, %s343
        %p345 = scmp.lt.s32.totalorder %s27, 1
        %s346 = scalar_select %p345, %s27, 1
        %p347 = scmp.lt.s32.totalorder %s28, 0
        %s348 = scalar_select %p347, %s28, 0
        %s349 = sadd.s32 %s348, %s346
        %s350 = smul.addr %s349, 8
        %s351 = scalar_lea.vmem %s5, %s350
        %s352 = sld [smem:[#allocation2 + %s27]]
        %s353 = sld [smem:[#allocation5 + %s27]]
        %s354 = sld [smem:[#allocation7 + %s27]]
        %s355 = sld [smem:[#allocation8 + %s27]]
        %s356 = smul.u32 %s28, 8
        %v357 = vlaneseq
        %v358 = vshrl.u32 %v357, 7
        %v359 = vstv %s356
        %v360 = vadd.s32 %v359, %v358
        %s361 = ssub.s32 %s354, %s355
        %p362 = scmp.gt.s32.totalorder %s361, 1
        %s363 = scalar_select %p362, %s361, 1
        %s364 = scvt.s32.f32 %s363
        %v365 = vstv %s364
        %v366 = vrcp.pop %v365
        %s367 = vtos %v366
        %v368 = vld [vmem:[%s351] sm:$0xff]
        %v369 = vstv %s367
        %v370 = vmul.f32 %v368, %v369
        %v371 = vsub.f32 1.0, %v370
        %v372 = vstv %s352
        %vm373 = vcmp.ge.s32.totalorder %v360, %v372
        %v374 = vstv %s353
        %vm375 = vcmp.le.s32.totalorder %v360, %v374
        %vm376 = vmand %vm373, %vm375
        %v377 = vstv %s354
        %vm378 = vcmp.ge.s32.totalorder %v360, %v377
        %vm379 = vmor %vm376, %vm378
        %v380 = vsel %vm379, 0.0, %v371
        %v381 = vld [vmem:[%s344] sm:$0xff]
        %383 = vset.pattern.permute.xlu0 0
        %384 = vperm.xlu0 %383, %v380
        %v385 = vpop.permute.xlu0 %384
        %v387 = vmul.f32 %v385, %v381
        %vm388 = vcmask 261120
        %389 = vst.msk [vmem:[%s337] sm:$0xff] %vm388, %v387
        %s390 = sand.u32 %s185, 1
        %s391 = scalar_lea.sflag [#allocation3], %s390
        %s392 = sand.u32 %s185, 1
        %s393 = smul.addr %s392, 8
        %s394 = scalar_lea.vmem [#allocation10], %s393
        // Predicated region
        $region61: #{tpu_custom_call.1} parent=43 // pred_check
          %p395 = pneg %p195
        $region62: #{tpu_custom_call.1} parent=43 // pred_check_branch
          %397 = sbr.rel (%p395) target = $region64
        $region63: #{tpu_custom_call.1} parent=43 // pred_region
          %s399 = ssub.s32 128, 128
          %400 = vsyncadd %s391, %s399
          %s401 = sadd.s32 %s28, %s27
          %s402 = smul.addr %s401, 128
          %s403 = scalar_lea.hbm %s6, %s402
          %s405 = sshll.u32 %s394, 4
          %s406 = int_to_ptr.vmem [resolvable:$true] %s405
          %408 = dma.vmem_to_hbm [thread:$0]  %s406, 128, %s403, %s391
        $region64: #{tpu_custom_call.1} parent=43 // pred_fallthru
          _
      $region44: #{tpu_custom_call.1} parent=5 // pred_fallthru
        _
      %p409 = scmp.le.s32.totalorder 2, %s18
      // Predicated region
      $region65: #{tpu_custom_call.1} parent=5 // pred_check
        %p410 = pneg %p409
      $region66: #{tpu_custom_call.1} parent=5 // pred_check_branch
        %412 = sbr.rel (%p410) target = $region68
      $region67: #{tpu_custom_call.1} parent=5 // pred_region
        %s413 = ssub.s32 %s18, 2
        // Predicated region
        $region69: #{tpu_custom_call.1} parent=67 // pred_check
          %p414 = pneg %p201
        $region70: #{tpu_custom_call.1} parent=67 // pred_check_branch
          %416 = sbr.rel (%p414) target = $region72
        $region71: #{tpu_custom_call.1} parent=67 // pred_region
          %s417 = sand.u32 %s186, 1
          %s418 = scalar_lea.sflag [#allocation3], %s417
          %s419 = sand.u32 %s186, 1
          %s420 = smul.addr %s419, 8
          %s421 = scalar_lea.vmem [#allocation10], %s420
          %422 = dma.done %s418, 128
        $region72: #{tpu_custom_call.1} parent=67 // pred_fallthru
          _
      $region68: #{tpu_custom_call.1} parent=5 // pred_fallthru
        _
    $region6: #{tpu_custom_call.1} parent=1 // loop_footer
      %s22 = sadd.s32 1, %s18
    $region7: #{tpu_custom_call.1} parent=1 // loop_footer_branch
      %17 = sbr.rel target = $region3
    $region8: #{tpu_custom_call.1} parent=1 // loop_exit
      _
    %423 = vsyncpa [#allocation3], 1
    %s424 = scalar_lea.sflag [#allocation3], 1
    %425 = vsyncpa %s424, 1
    %426 = vsyncpa [#allocation4], 1
    %s427 = scalar_lea.sflag [#allocation4], 1
    %428 = vsyncpa %s427, 1
    %429 = vsyncpa [#allocation6], 1
    %430 = vsyncpa [#allocation9], 1

</llo_original>
